<compile_context>
chip_gen: v7x
topology: tpu7x:2x2x1
jax: 0.10.0
libtpu: 0.0.40
codegen_flags: <defaults>
</compile_context>

<pallas_src>
import numpy as np
import jax
import jax.numpy as jnp
from jax.experimental import pallas as pl
from jax.experimental.pallas import tpu as pltpu


class InputCaught(ValueError):
    """Mirrors the torch module's `raise ValueError` after its side effects."""

    def __init__(self, result):
        super().__init__("InputCatcher intercepted forward")
        self.result = result


def _scatter_slot_kernel(idx_ref, inp_ref, cache_hbm_ref, out_slot_ref):
    # cache_hbm_ref exists only to be aliased with the output; it is never
    # read (untouched slots stay in place in HBM).  idx_ref is consumed by the
    # output index_map, so the body is a pure tile copy.
    del idx_ref, cache_hbm_ref
    out_slot_ref[0] = inp_ref[...]


def _lane_dense_shape(n_elems, max_lane=4096):
    """(rows, lane) with rows*lane == n_elems and lane a multiple of 128.

    Prefers the widest lane (<= max_lane) whose row count is a multiple of 8.
    Falls back to a single (1, n_elems) row when no multiple-of-128 divisor
    exists (legal: a block equal to the full dims bypasses the (8,128) rule).
    """
    best = 0
    best8 = 0
    for cand in range(128, min(n_elems, max_lane) + 1, 128):
        if n_elems % cand:
            continue
        best = cand
        if (n_elems // cand) % 8 == 0:
            best8 = cand
    lane = best8 or best or n_elems
    return n_elems // lane, lane


def _choose_tile_rows(rows, lane, itemsize, budget_bytes=2 * 1024 * 1024):
    """Largest divisor of `rows` that is sublane-legal and fits the VMEM budget."""
    limit = max(1, budget_bytes // max(1, lane * itemsize))
    legal = [d for d in range(1, rows + 1)
             if rows % d == 0 and (d % 8 == 0 or d == rows)]
    fitting = [d for d in legal if d <= limit]
    return max(fitting) if fitting else min(legal)


def input_catcher(inp, state, block_inputs, cache_i, *, raise_like_torch=True):
    """Pallas InputCatcher.forward.

    Semantics:
      block_inputs[cache_i] = inp   (single-slot scatter, Pallas kernel)
      cache_i += 1                  (host-side)
      cache_state = state           (returned unchanged, never copied)
      raise ValueError              (modelled by InputCaught carrying results)

    The cache buffer is aliased input->output; under jit with donation the
    caller must use the returned handle (the original array is invalidated).
    """
    max_calls = block_inputs.shape[0]
    slot_shape = block_inputs.shape[1:]
    if tuple(inp.shape) != tuple(slot_shape):
        raise ValueError(f"inp shape {inp.shape} != cache slot shape {slot_shape}")
    i = int(cache_i)
    if not 0 <= i < max_calls:
        # torch would raise an IndexError here; with a data-dependent
        # index_map an out-of-range index would be an unchecked OOB DMA,
        # so validate on the host before launching.
        raise IndexError(f"cache_i={i} out of range for {max_calls} cache slots")

    n = int(np.prod(slot_shape))
    rows, lane = _lane_dense_shape(n)
    itemsize = jnp.dtype(block_inputs.dtype).itemsize
    tile_rows = _choose_tile_rows(rows, lane, itemsize)
    num_tiles = rows // tile_rows

    if inp.dtype != block_inputs.dtype:
        inp = inp.astype(block_inputs.dtype)
    inp2d = jnp.reshape(inp, (rows, lane))
    cache3d = jnp.reshape(block_inputs, (max_calls, rows, lane))
    idx = jnp.asarray([i], dtype=jnp.int32)

    grid_spec = pltpu.PrefetchScalarGridSpec(
        num_scalar_prefetch=1,
        grid=(num_tiles,),
        in_specs=[
            # Row tile of the captured activation (auto-pipelined HBM->VMEM).
            pl.BlockSpec((tile_rows, lane), lambda t, i_ref: (t, 0)),
            # Whole cache, left in HBM: only aliased, never DMA'd or read.
            pl.BlockSpec(memory_space=pl.ANY),
        ],
        # The scalar-prefetched call index selects the target slot directly,
        # so the grid never visits (or copies) any other slot.
        out_specs=pl.BlockSpec((1, tile_rows, lane),
                               lambda t, i_ref: (i_ref[0], t, 0)),
    )

    new_cache3d = pl.pallas_call(
        _scatter_slot_kernel,
        grid_spec=grid_spec,
        out_shape=jax.ShapeDtypeStruct(cache3d.shape, cache3d.dtype),
        # block_inputs (arg index 2, counting the prefetched scalar) aliases
        # the output: untouched slots cost zero HBM traffic.
        input_output_aliases={2: 0},
        compiler_params=pltpu.CompilerParams(
            dimension_semantics=("parallel",)),
    )(idx, inp2d, cache3d)

    new_cache = jnp.reshape(new_cache3d, block_inputs.shape)
    # Counter bump and state stash stay on the host: no device work, no sync.
    result = (new_cache, state, i + 1)
    if raise_like_torch:
        # TODO(synk): `raise ValueError` has no in-kernel equivalent; it is
        # reproduced on the Python side after the kernel's side effects.
        raise InputCaught(result)
    return result


if __name__ == "__main__":
    key = jax.random.PRNGKey(0)
    B, S, H = 2, 8, 32        # (batch, seq, hidden) block input
    MAX_CALLS = 4             # capacity of block_inputs

    k1, k2, k3 = jax.random.split(key, 3)
    inp = jax.random.normal(k1, (B, S, H), dtype=jnp.float32)
    state = jax.random.normal(k2, (B, S, H), dtype=jnp.float32)
    block_inputs = jax.random.normal(k3, (MAX_CALLS, B, S, H), dtype=jnp.float32)

    cache = {"i": 1, "state": None}   # pretend this is the second captured call

    # Snapshot the reference BEFORE the call: the cache buffer is aliased into
    # the kernel output, so the caller must rely only on the returned handle.
    ref_cache = np.array(block_inputs)
    ref_cache[cache["i"]] = np.array(inp)
    ref_state = np.array(state)

    try:
        input_catcher(inp, state, block_inputs, cache["i"])
        raise RuntimeError("InputCatcher should have raised")
    except InputCaught as e:
        new_cache, new_state, new_i = e.result

    jax.block_until_ready((new_cache, new_state))

    assert np.allclose(np.array(new_cache), ref_cache)
    assert np.allclose(np.array(new_state), ref_state)
    assert new_i == cache["i"] + 1

    cache["i"] = new_i
    cache["state"] = new_state

    print("KERNEL_OK")
</pallas_src>

<mosaic_0001>
module attributes {stable_mosaic.version = 11 : i64} {
  func.func @_scatter_slot_kernel(%arg0: i32, %arg1: memref<1xi32, #tpu.memory_space<smem>>, %arg2: memref<1x512xf32, #tpu.memory_space<vmem>>, %arg3: memref<4x1x512xf32, #tpu.memory_space<any>>, %arg4: memref<1x1x512xf32, #tpu.memory_space<vmem>>) attributes {dimension_semantics = [#tpu.dimension_semantics<parallel>], iteration_bounds = array<i64: 1>, scalar_prefetch = 1 : i64, scratch_operands = 0 : i64, tpu.core_type = #tpu.core_type<tc>, window_params = [{transform_indices = @transform_0, window_bounds = array<i64: 1, 512>}, {}, {transform_indices = @transform_2, window_bounds = array<i64: 1, 1, 512>}]} {
    %c0 = arith.constant 0 : index
    %c0_0 = arith.constant 0 : index
    %0 = vector.load %arg2[%c0, %c0_0] : memref<1x512xf32, #tpu.memory_space<vmem>>, vector<1x512xf32>
    %c0_1 = arith.constant 0 : index
    %c0_2 = arith.constant 0 : index
    %c0_3 = arith.constant 0 : index
    %1 = vector.load %arg4[%c0_1, %c0_2, %c0_3] : memref<1x1x512xf32, #tpu.memory_space<vmem>>, vector<1x1x512xf32>
    %2 = vector.shape_cast %1 : vector<1x1x512xf32> to vector<1x512xf32>
    %3 = vector.shape_cast %0 : vector<1x512xf32> to vector<1x1x512xf32>
    tpu.vector_store %arg4[%c0_1, %c0_2, %c0_3], %3 {strides = array<i32>} : memref<1x1x512xf32, #tpu.memory_space<vmem>>, vector<1x1x512xf32>,
    return
  }
  func.func @transform_0(%arg0: i32, %arg1: memref<1xi32, #tpu.memory_space<smem>>) -> (i32, i32) {
    %c0_i32 = arith.constant 0 : i32
    %c0_i32_0 = arith.constant 0 : i32
    return %arg0, %c0_i32 : i32, i32
  }
  func.func @transform_2(%arg0: i32, %arg1: memref<1xi32, #tpu.memory_space<smem>>) -> (i32, i32, i32) {
    %c0 = arith.constant 0 : index
    %0 = memref.load %arg1[%c0] : memref<1xi32, #tpu.memory_space<smem>>
    %c0_i32 = arith.constant 0 : i32
    %c0_i32_0 = arith.constant 0 : i32
    return %0, %arg0, %c0_i32 : i32, i32, i32
  }
}

</mosaic_0001>

<llo_original>
// kernel: tpu_custom_call.1
$region0: #{tpu_custom_call.1}
  #allocation0 [shape = 'u32[]', space=smem, size = 0x4, offset = 0x4, fixed_abs, tag = 'smem constant byte address 0x4 - core index']
  #allocation1 [shape = 'u32[144,128]{1,0:T(1,128)}', space=vmem, size = 0x12000, scoped, tag = 'internal scratch']
  #allocation2 [shape = 's32[1]{0}', space=sflag, size = 0x4, scoped, tag = 'scoped memory for tpu_custom_call.1']
  #allocation3 [shape = 's32[1]{0:T(128)S(6)}', space=smem, size = 0x200, scoped, tag = 'prefetched SMEM operand 0']
  %s0 = inlined_call_operand.<no memory space> [shape: s32[1], index: 0, kind: input, shape index: {}]
  %s1 = inlined_call_operand.vmem [shape: f32[1,512], index: 1, kind: input, shape index: {}]
  %s2 = inlined_call_operand.hbm [shape: f32[4,1,512], index: 2, kind: input, shape index: {}, may-alias: {2,3}]
  %s3 = inlined_call_operand.hbm [shape: f32[4,1,512], index: 3, kind: output, shape index: {}, may-alias: {2,3}]
  %s4 = sld [smem:[#allocation0]]
  $region14: #{tpu_custom_call.1} parent=0
    _
  %s6 = ssub.s32 1, %s4
  %s7 = scalar_select 0, %s6, %s4
  %8 = sst [smem:[#allocation3]] %s0
  $region1: #{tpu_custom_call.1} parent=0
    #allocation4 [shape = 'u8[2048]{0}', space=vmem, size = 0x800, scoped, tag = 'output window, operand 0, single buffered']
    #allocation5 [shape = 's32[1]{0}', space=sflag, size = 0x4, scoped, tag = 'scoped memory for tpu_custom_call.1']
    %9 = vsyncpa [#allocation5], 0
    // Predicated region
    $region2: #{tpu_custom_call.1} parent=1 // pred_check
      _
    $region3: #{tpu_custom_call.1} parent=1 // pred_check_branch
      %11 = sbr.rel (0) target = $region5
    $region4: #{tpu_custom_call.1} parent=1 // pred_region
      _
    $region5: #{tpu_custom_call.1} parent=1 // pred_fallthru
      _
    %s12 = sld [smem:[#allocation3]]
    %v13 = vld [vmem:[%s1] sm:$0xf]
    %v14 = vlaneseq
    %vm15 = vcmp.ge.s32.totalorder %v14, 0
    %vm16 = vcmp.lt.s32.totalorder %v14, 512
    %vm17 = vmand %vm15, %vm16
    %18 = vst.msk [vmem:[#allocation4] sm:$0xf] %vm17, %v13
    // Predicated region
    $region6: #{tpu_custom_call.1} parent=1 // pred_check
      _
    $region7: #{tpu_custom_call.1} parent=1 // pred_check_branch
      %20 = sbr.rel (0) target = $region9
    $region8: #{tpu_custom_call.1} parent=1 // pred_region
      %s21 = sld [smem:[#allocation3]]
      %s23 = ssub.s32 64, 64
      %24 = vsyncadd [#allocation5], %s23
      %s25 = smul.addr %s21, 4
      %s26 = smul.addr %s25, 16
      %s27 = scalar_lea.hbm %s3, %s26
      %s29 = sshll.u32 [#allocation4], 4
      %s30 = int_to_ptr.vmem [resolvable:$true] %s29
      %32 = dma.vmem_to_hbm [thread:$0]  %s30, 64, %s27, [#allocation5]
    $region9: #{tpu_custom_call.1} parent=1 // pred_fallthru
      _
    // Predicated region
    $region10: #{tpu_custom_call.1} parent=1 // pred_check
      _
    $region11: #{tpu_custom_call.1} parent=1 // pred_check_branch
      %34 = sbr.rel (0) target = $region13
    $region12: #{tpu_custom_call.1} parent=1 // pred_region
      %35 = dma.done [#allocation5], 64
    $region13: #{tpu_custom_call.1} parent=1 // pred_fallthru
      _
    %36 = vsyncpa [#allocation5], 1

</llo_original>
